<compile_context>
chip_gen: v5e
topology: v5e:2x2
jax: 0.10.0
libtpu: 0.0.40
codegen_flags: <defaults>
</compile_context>

<pallas_src>
import jax
import jax.numpy as jnp
from jax.experimental import pallas as pl
from jax.experimental.pallas import tpu as pltpu

_IN_FEATURES = 512   # K  (C*H*W after flatten)
_OUT_FEATURES = 10   # true N of the Linear layer
_LANE = 128          # lane width: pad N to this for lane-dense (unmasked) stores
_SUBLANE = 8         # f32 sublane count
_MAX_TB = 512        # max batch-tile rows per grid step


def _linear_kernel(x_ref, w_ref, b_ref, o_ref):
    # x_ref: [TB, 512]  f32 VMEM  (partial block at the batch edge -> undefined
    #                              padded rows; sliced off by the wrapper)
    # w_ref: [512, 128] bf16 VMEM (torch [10,512] weight, packed once)
    # b_ref: [8, 128]   f32 VMEM  (bias tile; sublane-broadcast inside kernel)
    # o_ref: [TB, 128]  f32 VMEM  (lane-dense output, unmasked vst)
    acc = jnp.dot(
        x_ref[...].astype(jnp.bfloat16),      # cheap VPU cast -> bf16 MXU pass
        w_ref[...],
        preferred_element_type=jnp.float32,   # f32 accumulation
    )
    o_ref[...] = acc + b_ref[0:1, :]          # in-kernel sublane broadcast add


def prepare_params(w, b):
    """One-time (param-load time) packing of the torch nn.Linear(512, 10) params.

    Args:
      w: [10, 512] float (PyTorch Linear weight layout)
      b: [10] float
    Returns:
      w_packed: [512, 128] bf16 (transposed, zero-padded on N)
      b_packed: [8, 128]   f32  (zero-padded on N, broadcast to a full vreg tile)
    """
    w_packed = jnp.zeros((_IN_FEATURES, _LANE), jnp.bfloat16)
    w_packed = w_packed.at[:, :_OUT_FEATURES].set(
        jnp.transpose(w).astype(jnp.bfloat16)
    )
    b_row = jnp.zeros((_LANE,), jnp.float32).at[:_OUT_FEATURES].set(
        b.astype(jnp.float32)
    )
    b_packed = jnp.broadcast_to(b_row[None, :], (_SUBLANE, _LANE))
    return w_packed, b_packed


@jax.jit
def classifier_gan_mlp_forward(x_nchw, w_packed, b_packed):
    """Pallas forward for ClassifierGAN_MLP.

    Args:
      x_nchw:   [B, C, H, W] float32 with C*H*W == 512
      w_packed: [512, 128] bfloat16 from prepare_params
      b_packed: [8, 128]   float32  from prepare_params
    Returns:
      logits: [B, 10] float32
    """
    B = x_nchw.shape[0]
    # TODO(synk): this flatten is a genuine retile (last dim changes); fold it
    # into the upstream producer when fusing the head.
    x_flat = jnp.reshape(x_nchw, (B, -1))        # == torch x.view(B, -1)
    assert x_flat.shape[1] == _IN_FEATURES, x_flat.shape

    # Batch tile: full (rounded-up) batch for small B, capped at 512 rows so
    # larger batches pipeline and stay far under v7x's 64 MiB VMEM.
    tb = min(_MAX_TB, ((B + _SUBLANE - 1) // _SUBLANE) * _SUBLANE)
    num_blocks = -(-B // tb)
    out_rows = num_blocks * tb                   # full output blocks (no masking)

    out_padded = pl.pallas_call(
        _linear_kernel,
        out_shape=jax.ShapeDtypeStruct((out_rows, _LANE), jnp.float32),
        grid=(num_blocks,),
        in_specs=[
            pl.BlockSpec((tb, _IN_FEATURES), lambda i: (i, 0)),   # x (partial edge ok)
            pl.BlockSpec((_IN_FEATURES, _LANE), lambda i: (0, 0)),  # weight
            pl.BlockSpec((_SUBLANE, _LANE), lambda i: (0, 0)),      # bias tile
        ],
        out_specs=pl.BlockSpec((tb, _LANE), lambda i: (i, 0)),
        compiler_params=pltpu.CompilerParams(
            dimension_semantics=("parallel",),   # shards batch tiles across TCs on v7x
        ),
    )(x_flat, w_packed, b_packed)

    return out_padded[:B, :_OUT_FEATURES]


if __name__ == "__main__":
    key = jax.random.PRNGKey(0)
    kx, kw, kb = jax.random.split(key, 3)

    # Small shapes consistent with the module: B=2, C=8, H=8, W=8 -> 512 features.
    B, C, H, W = 2, 8, 8, 8
    x = jax.random.normal(kx, (B, C, H, W), dtype=jnp.float32)

    # Deterministic synthetic params (shapes from nn.Linear(512, 10)).
    w = jax.random.normal(kw, (10, 512), dtype=jnp.float32) * 0.02
    b = jax.random.normal(kb, (10,), dtype=jnp.float32) * 0.02

    # One-time packing (the "param-load time" transpose / pad / bf16 cast).
    w_packed, b_packed = prepare_params(w, b)

    logits = classifier_gan_mlp_forward(x, w_packed, b_packed)
    logits = jax.block_until_ready(logits)

    # Reference matching the kernel's bf16-input / f32-accumulate matmul.
    x_flat = jnp.reshape(x, (B, -1))
    ref = (
        x_flat.astype(jnp.bfloat16).astype(jnp.float32)
        @ w.astype(jnp.bfloat16).astype(jnp.float32).T
        + b
    )
    assert logits.shape == (B, 10), logits.shape
    assert jnp.allclose(logits, ref, atol=2e-2, rtol=2e-2), (
        float(jnp.max(jnp.abs(logits - ref)))
    )

    print("KERNEL_OK")
</pallas_src>

<mosaic_0001>
module attributes {stable_mosaic.version = 11 : i64} {
  func.func @_linear_kernel(%arg0: i32, %arg1: memref<8x512xf32, #tpu.memory_space<vmem>>, %arg2: memref<512x128xbf16, #tpu.memory_space<vmem>>, %arg3: memref<8x128xf32, #tpu.memory_space<vmem>>, %arg4: memref<8x128xf32, #tpu.memory_space<vmem>>) attributes {dimension_semantics = [#tpu.dimension_semantics<parallel>], iteration_bounds = array<i64: 1>, scalar_prefetch = 0 : i64, scratch_operands = 0 : i64, tpu.core_type = #tpu.core_type<tc>, window_params = [{transform_indices = @transform_0, window_bounds = array<i64: 8, 512>}, {pipeline_mode = #tpu.pipeline_mode<synchronous>, transform_indices = @transform_1, window_bounds = array<i64: 512, 128>}, {pipeline_mode = #tpu.pipeline_mode<synchronous>, transform_indices = @transform_2, window_bounds = array<i64: 8, 128>}, {transform_indices = @transform_3, window_bounds = array<i64: 8, 128>}]} {
    %c0 = arith.constant 0 : index
    %c0_0 = arith.constant 0 : index
    %0 = vector.load %arg1[%c0, %c0_0] : memref<8x512xf32, #tpu.memory_space<vmem>>, vector<8x512xf32>
    %1 = arith.truncf %0 : vector<8x512xf32> to vector<8x512xbf16>
    %c0_1 = arith.constant 0 : index
    %c0_2 = arith.constant 0 : index
    %2 = vector.load %arg2[%c0_1, %c0_2] : memref<512x128xbf16, #tpu.memory_space<vmem>>, vector<512x128xbf16>
    %cst = arith.constant dense<0.000000e+00> : vector<8x128xf32>
    %3 = tpu.matmul %1, %2, %cst {dimension_numbers = #tpu.dot_dimension_numbers<[1], [0], [0], [1], [0, 0, 1, 1], [], []>} : vector<8x512xbf16>, vector<512x128xbf16>, vector<8x128xf32> -> vector<8x128xf32>
    %c0_3 = arith.constant 0 : index
    %c0_4 = arith.constant 0 : index
    %4 = vector.load %arg3[%c0_3, %c0_4] : memref<8x128xf32, #tpu.memory_space<vmem>>, vector<1x128xf32>
    %5 = vector.broadcast %4 : vector<1x128xf32> to vector<8x128xf32>
    %6 = arith.addf %3, %5 : vector<8x128xf32>
    %c0_5 = arith.constant 0 : index
    %c0_6 = arith.constant 0 : index
    %7 = vector.load %arg4[%c0_5, %c0_6] : memref<8x128xf32, #tpu.memory_space<vmem>>, vector<8x128xf32>
    tpu.vector_store %arg4[%c0_5, %c0_6], %6 {strides = array<i32>} : memref<8x128xf32, #tpu.memory_space<vmem>>, vector<8x128xf32>,
    return
  }
  func.func @transform_0(%arg0: i32) -> (i32, i32) {
    %c0_i32 = arith.constant 0 : i32
    %c0_i32_0 = arith.constant 0 : i32
    return %arg0, %c0_i32 : i32, i32
  }
  func.func @transform_1(%arg0: i32) -> (i32, i32) {
    %c0_i32 = arith.constant 0 : i32
    %c0_i32_0 = arith.constant 0 : i32
    %c0_i32_1 = arith.constant 0 : i32
    return %c0_i32, %c0_i32_0 : i32, i32
  }
  func.func @transform_2(%arg0: i32) -> (i32, i32) {
    %c0_i32 = arith.constant 0 : i32
    %c0_i32_0 = arith.constant 0 : i32
    %c0_i32_1 = arith.constant 0 : i32
    return %c0_i32, %c0_i32_0 : i32, i32
  }
  func.func @transform_3(%arg0: i32) -> (i32, i32) {
    %c0_i32 = arith.constant 0 : i32
    %c0_i32_0 = arith.constant 0 : i32
    return %arg0, %c0_i32 : i32, i32
  }
}

</mosaic_0001>

<llo_original>
// kernel: classifier_gan_mlp_forward.1
$region0: #{classifier_gan_mlp_forward.1}
  #allocation0 [shape = 'u32[]', space=smem, size = 0x4, offset = 0x4, fixed_abs, tag = 'smem constant byte address 0x4 - core index']
  #allocation1 [shape = 'u32[72,128]{1,0:T(1,128)}', space=vmem, size = 0x9000, scoped, tag = 'internal scratch']
  %s0 = inlined_call_operand.vmem [shape: f32[2,512], index: 0, kind: input, shape index: {}]
  %s1 = inlined_call_operand.hbm [shape: bf16[512,128], index: 1, kind: input, shape index: {}]
  %s2 = inlined_call_operand.vmem [shape: f32[8,128], index: 2, kind: input, shape index: {}]
  %s3 = inlined_call_operand.vmem [shape: f32[8,128], index: 3, kind: output, shape index: {}]
  %s4 = sld [smem:[#allocation0]]
  $region26: #{classifier_gan_mlp_forward.1} parent=0
    _
  %s6 = ssub.s32 1, %s4
  %s7 = scalar_select 0, %s6, %s4
  $region1: #{classifier_gan_mlp_forward.1} parent=0
    #allocation2 [shape = 'u8[131072]{0}', space=vmem, size = 0x20000, scoped, tag = 'input window, operand 1, single buffered']
    #allocation3 [shape = 's32[1]{0}', space=sflag, size = 0x4, scoped, tag = 'scoped memory for classifier_gan_mlp_forward.1']
    %8 = vsyncpa [#allocation3], 0
    // Predicated region
    $region2: #{classifier_gan_mlp_forward.1} parent=1 // pred_check
      _
    $region3: #{classifier_gan_mlp_forward.1} parent=1 // pred_check_branch
      %10 = sbr.rel (0) target = $region5
    $region4: #{classifier_gan_mlp_forward.1} parent=1 // pred_region
      _
    $region5: #{classifier_gan_mlp_forward.1} parent=1 // pred_fallthru
      _
    // Predicated region
    $region6: #{classifier_gan_mlp_forward.1} parent=1 // pred_check
      _
    $region7: #{classifier_gan_mlp_forward.1} parent=1 // pred_check_branch
      %12 = sbr.rel (0) target = $region9
    $region8: #{classifier_gan_mlp_forward.1} parent=1 // pred_region
      %14 = vsyncadd [#allocation3], 0
      %s15 = sshll.u32 %s1, 4
      %s16 = int_to_ptr.hbm [resolvable:$true] %s15
      %s17 = sshll.u32 [#allocation2], 4
      %s18 = int_to_ptr.vmem [resolvable:$true] %s17
      %23 = dma.hbm_to_vmem [thread:$0]  %s16, 4096, %s18, [#allocation3], 64, 64, 4
    $region9: #{classifier_gan_mlp_forward.1} parent=1 // pred_fallthru
      _
    // Predicated region
    $region10: #{classifier_gan_mlp_forward.1} parent=1 // pred_check
      _
    $region11: #{classifier_gan_mlp_forward.1} parent=1 // pred_check_branch
      %25 = sbr.rel (0) target = $region13
    $region12: #{classifier_gan_mlp_forward.1} parent=1 // pred_region
      _
    $region13: #{classifier_gan_mlp_forward.1} parent=1 // pred_fallthru
      _
    // Predicated region
    $region14: #{classifier_gan_mlp_forward.1} parent=1 // pred_check
      _
    $region15: #{classifier_gan_mlp_forward.1} parent=1 // pred_check_branch
      %27 = sbr.rel (0) target = $region17
    $region16: #{classifier_gan_mlp_forward.1} parent=1 // pred_region
      %29 = dma.done [#allocation3], 4096
    $region17: #{classifier_gan_mlp_forward.1} parent=1 // pred_fallthru
      _
    %v30 = vld [vmem:[%s0] sm:$0xff]
    %v31 = vld [vmem:[%s0 + $0x8] sm:$0xff]
    %v32 = vld [vmem:[%s0 + $0x10] sm:$0xff]
    %v33 = vld [vmem:[%s0 + $0x18] sm:$0xff]
    %38 = vst [vmem:[#allocation1] ss:$4 sm:$0xff] %v30
    %s39 = scalar_lea.vmem [#allocation1], 1
    %40 = vst [vmem:[%s39] ss:$4 sm:$0xff] %v31
    %s41 = scalar_lea.vmem [#allocation1], 2
    %42 = vst [vmem:[%s41] ss:$4 sm:$0xff] %v32
    %s43 = scalar_lea.vmem [#allocation1], 3
    %44 = vst [vmem:[%s43] ss:$4 sm:$0xff] %v33
    %v45 = vld.sshfl [vmem:[#allocation1] sm:$0xff pattern:$0x73625140]
    %v46 = vld.sshfl [vmem:[#allocation1 + $0x8] sm:$0xff pattern:$0x73625140]
    %v47 = vld.sshfl [vmem:[#allocation1 + $0x10] sm:$0xff pattern:$0x73625140]
    %v48 = vld.sshfl [vmem:[#allocation1 + $0x18] sm:$0xff pattern:$0x73625140]
    %v53 = vpack.c.bf16 %v45, %v45
    %v54 = vpack.c.bf16 %v46, %v46
    %v55 = vpack.c.bf16 %v47, %v47
    %v56 = vpack.c.bf16 %v48, %v48
    %v57 = vld [vmem:[#allocation2] sm:$0xf]
    %v58 = vld [vmem:[#allocation2 + $0x4] sm:$0xf]
    %v59 = vld [vmem:[#allocation2 + $0x8] sm:$0xf]
    %v60 = vld [vmem:[#allocation2 + $0xc] sm:$0xf]
    %v61 = vld [vmem:[#allocation2 + $0x10] sm:$0xf]
    %v62 = vld [vmem:[#allocation2 + $0x14] sm:$0xf]
    %v63 = vld [vmem:[#allocation2 + $0x18] sm:$0xf]
    %v64 = vld [vmem:[#allocation2 + $0x1c] sm:$0xf]
    %v65 = vld [vmem:[#allocation2 + $0x20] sm:$0xf]
    %v66 = vld [vmem:[#allocation2 + $0x24] sm:$0xf]
    %v67 = vld [vmem:[#allocation2 + $0x28] sm:$0xf]
    %v68 = vld [vmem:[#allocation2 + $0x2c] sm:$0xf]
    %v69 = vld [vmem:[#allocation2 + $0x30] sm:$0xf]
    %v70 = vld [vmem:[#allocation2 + $0x34] sm:$0xf]
    %v71 = vld [vmem:[#allocation2 + $0x38] sm:$0xf]
    %v72 = vld [vmem:[#allocation2 + $0x3c] sm:$0xf]
    %v73 = vld [vmem:[#allocation2 + $0x40] sm:$0xf]
    %v74 = vld [vmem:[#allocation2 + $0x44] sm:$0xf]
    %v75 = vld [vmem:[#allocation2 + $0x48] sm:$0xf]
    %v76 = vld [vmem:[#allocation2 + $0x4c] sm:$0xf]
    %v77 = vld [vmem:[#allocation2 + $0x50] sm:$0xf]
    %v78 = vld [vmem:[#allocation2 + $0x54] sm:$0xf]
    %v79 = vld [vmem:[#allocation2 + $0x58] sm:$0xf]
    %v80 = vld [vmem:[#allocation2 + $0x5c] sm:$0xf]
    %v81 = vld [vmem:[#allocation2 + $0x60] sm:$0xf]
    %v82 = vld [vmem:[#allocation2 + $0x64] sm:$0xf]
    %v83 = vld [vmem:[#allocation2 + $0x68] sm:$0xf]
    %v84 = vld [vmem:[#allocation2 + $0x6c] sm:$0xf]
    %v85 = vld [vmem:[#allocation2 + $0x70] sm:$0xf]
    %v86 = vld [vmem:[#allocation2 + $0x74] sm:$0xf]
    %v87 = vld [vmem:[#allocation2 + $0x78] sm:$0xf]
    %v88 = vld [vmem:[#allocation2 + $0x7c] sm:$0xf]
    %v89 = vld [vmem:[#allocation2 + $0x80] sm:$0xf]
    %v90 = vld [vmem:[#allocation2 + $0x84] sm:$0xf]
    %v91 = vld [vmem:[#allocation2 + $0x88] sm:$0xf]
    %v92 = vld [vmem:[#allocation2 + $0x8c] sm:$0xf]
    %v93 = vld [vmem:[#allocation2 + $0x90] sm:$0xf]
    %v94 = vld [vmem:[#allocation2 + $0x94] sm:$0xf]
    %v95 = vld [vmem:[#allocation2 + $0x98] sm:$0xf]
    %v96 = vld [vmem:[#allocation2 + $0x9c] sm:$0xf]
    %v97 = vld [vmem:[#allocation2 + $0xa0] sm:$0xf]
    %v98 = vld [vmem:[#allocation2 + $0xa4] sm:$0xf]
    %v99 = vld [vmem:[#allocation2 + $0xa8] sm:$0xf]
    %v100 = vld [vmem:[#allocation2 + $0xac] sm:$0xf]
    %v101 = vld [vmem:[#allocation2 + $0xb0] sm:$0xf]
    %v102 = vld [vmem:[#allocation2 + $0xb4] sm:$0xf]
    %v103 = vld [vmem:[#allocation2 + $0xb8] sm:$0xf]
    %v104 = vld [vmem:[#allocation2 + $0xbc] sm:$0xf]
    %v105 = vld [vmem:[#allocation2 + $0xc0] sm:$0xf]
    %v106 = vld [vmem:[#allocation2 + $0xc4] sm:$0xf]
    %v107 = vld [vmem:[#allocation2 + $0xc8] sm:$0xf]
    %v108 = vld [vmem:[#allocation2 + $0xcc] sm:$0xf]
    %v109 = vld [vmem:[#allocation2 + $0xd0] sm:$0xf]
    %v110 = vld [vmem:[#allocation2 + $0xd4] sm:$0xf]
    %v111 = vld [vmem:[#allocation2 + $0xd8] sm:$0xf]
    %v112 = vld [vmem:[#allocation2 + $0xdc] sm:$0xf]
    %v113 = vld [vmem:[#allocation2 + $0xe0] sm:$0xf]
    %v114 = vld [vmem:[#allocation2 + $0xe4] sm:$0xf]
    %v115 = vld [vmem:[#allocation2 + $0xe8] sm:$0xf]
    %v116 = vld [vmem:[#allocation2 + $0xec] sm:$0xf]
    %v117 = vld [vmem:[#allocation2 + $0xf0] sm:$0xf]
    %v118 = vld [vmem:[#allocation2 + $0xf4] sm:$0xf]
    %v119 = vld [vmem:[#allocation2 + $0xf8] sm:$0xf]
    %v120 = vld [vmem:[#allocation2 + $0xfc] sm:$0xf]
    %v121 = vld [vmem:[%s2] sm:$0x1]
    %v122 = vperm.slane %v121, 0
    %v187 = vunpack.c.l.b16 %v57
    %v188 = vunpack.c.l.b16 %v58
    %v189 = vunpack.c.l.b16 %v59
    %v190 = vunpack.c.l.b16 %v60
    %v191 = vunpack.c.l.b16 %v61
    %v192 = vunpack.c.l.b16 %v62
    %v193 = vunpack.c.l.b16 %v63
    %v194 = vunpack.c.l.b16 %v64
    %v195 = vunpack.c.l.b16 %v65
    %v196 = vunpack.c.l.b16 %v66
    %v197 = vunpack.c.l.b16 %v67
    %v198 = vunpack.c.l.b16 %v68
    %v199 = vunpack.c.l.b16 %v69
    %v200 = vunpack.c.l.b16 %v70
    %v201 = vunpack.c.l.b16 %v71
    %v202 = vunpack.c.l.b16 %v72
    %v203 = vunpack.c.l.b16 %v73
    %v204 = vunpack.c.l.b16 %v74
    %v205 = vunpack.c.l.b16 %v75
    %v206 = vunpack.c.l.b16 %v76
    %v207 = vunpack.c.l.b16 %v77
    %v208 = vunpack.c.l.b16 %v78
    %v209 = vunpack.c.l.b16 %v79
    %v210 = vunpack.c.l.b16 %v80
    %v211 = vunpack.c.l.b16 %v81
    %v212 = vunpack.c.l.b16 %v82
    %v213 = vunpack.c.l.b16 %v83
    %v214 = vunpack.c.l.b16 %v84
    %v215 = vunpack.c.l.b16 %v85
    %v216 = vunpack.c.l.b16 %v86
    %v217 = vunpack.c.l.b16 %v87
    %v218 = vunpack.c.l.b16 %v88
    %v219 = vunpack.c.l.b16 %v89
    %v220 = vunpack.c.l.b16 %v90
    %v221 = vunpack.c.l.b16 %v91
    %v222 = vunpack.c.l.b16 %v92
    %v223 = vunpack.c.l.b16 %v93
    %v224 = vunpack.c.l.b16 %v94
    %v225 = vunpack.c.l.b16 %v95
    %v226 = vunpack.c.l.b16 %v96
    %v227 = vunpack.c.l.b16 %v97
    %v228 = vunpack.c.l.b16 %v98
    %v229 = vunpack.c.l.b16 %v99
    %v230 = vunpack.c.l.b16 %v100
    %v231 = vunpack.c.l.b16 %v101
    %v232 = vunpack.c.l.b16 %v102
    %v233 = vunpack.c.l.b16 %v103
    %v234 = vunpack.c.l.b16 %v104
    %v235 = vunpack.c.l.b16 %v105
    %v236 = vunpack.c.l.b16 %v106
    %v237 = vunpack.c.l.b16 %v107
    %v238 = vunpack.c.l.b16 %v108
    %v239 = vunpack.c.l.b16 %v109
    %v240 = vunpack.c.l.b16 %v110
    %v241 = vunpack.c.l.b16 %v111
    %v242 = vunpack.c.l.b16 %v112
    %v243 = vunpack.c.l.b16 %v113
    %v244 = vunpack.c.l.b16 %v114
    %v245 = vunpack.c.l.b16 %v115
    %v246 = vunpack.c.l.b16 %v116
    %v247 = vunpack.c.l.b16 %v117
    %v248 = vunpack.c.l.b16 %v118
    %v249 = vunpack.c.l.b16 %v119
    %v250 = vunpack.c.l.b16 %v120
    %v251 = vpack.c.b16 %v188, %v187
    %v252 = vpack.c.b16 %v190, %v189
    %v253 = vpack.c.b16 %v192, %v191
    %v254 = vpack.c.b16 %v194, %v193
    %v255 = vpack.c.b16 %v196, %v195
    %v256 = vpack.c.b16 %v198, %v197
    %v257 = vpack.c.b16 %v200, %v199
    %v258 = vpack.c.b16 %v202, %v201
    %v259 = vpack.c.b16 %v204, %v203
    %v260 = vpack.c.b16 %v206, %v205
    %v261 = vpack.c.b16 %v208, %v207
    %v262 = vpack.c.b16 %v210, %v209
    %v263 = vpack.c.b16 %v212, %v211
    %v264 = vpack.c.b16 %v214, %v213
    %v265 = vpack.c.b16 %v216, %v215
    %v266 = vpack.c.b16 %v218, %v217
    %v267 = vpack.c.b16 %v220, %v219
    %v268 = vpack.c.b16 %v222, %v221
    %v269 = vpack.c.b16 %v224, %v223
    %v270 = vpack.c.b16 %v226, %v225
    %v271 = vpack.c.b16 %v228, %v227
    %v272 = vpack.c.b16 %v230, %v229
    %v273 = vpack.c.b16 %v232, %v231
    %v274 = vpack.c.b16 %v234, %v233
    %v275 = vpack.c.b16 %v236, %v235
    %v276 = vpack.c.b16 %v238, %v237
    %v277 = vpack.c.b16 %v240, %v239
    %v278 = vpack.c.b16 %v242, %v241
    %v279 = vpack.c.b16 %v244, %v243
    %v280 = vpack.c.b16 %v246, %v245
    %v281 = vpack.c.b16 %v248, %v247
    %v282 = vpack.c.b16 %v250, %v249
    %315 = vmatpush.bf16.msra.mxu0 %v258
    %316 = vmatpush.bf16.msra.mxu0 %v257
    %317 = vmatpush.bf16.msra.mxu0 %v256
    %318 = vmatpush.bf16.msra.mxu0 %v255
    %319 = vmatpush.bf16.msra.mxu0 %v254
    %320 = vmatpush.bf16.msra.mxu0 %v253
    %321 = vmatpush.bf16.msra.mxu0 %v252
    %322 = vmatpush.bf16.msra.mxu0 %v251
    %323 = vmatmul.bf16.gmra.mxu0 %v53
    %v324 = vpop.f32.mrf.mxu0
    %v325 = vadd.f32 %v122, %v324
    %v326 = vpop.f32.mrf.mxu0
    %327 = vdwg.mxu0
    %328 = vmatpush.bf16.msra.mxu0 %v266
    %329 = vmatpush.bf16.msra.mxu0 %v265
    %330 = vmatpush.bf16.msra.mxu0 %v264
    %331 = vmatpush.bf16.msra.mxu0 %v263
    %332 = vmatpush.bf16.msra.mxu0 %v262
    %333 = vmatpush.bf16.msra.mxu0 %v261
    %334 = vmatpush.bf16.msra.mxu0 %v260
    %335 = vmatpush.bf16.msra.mxu0 %v259
    %336 = vmatmul.bf16.gmra.mxu0 %v54
    %v337 = vpop.f32.mrf.mxu0
    %v338 = vadd.f32 %v325, %v337
    %v339 = vpop.f32.mrf.mxu0
    %340 = vdwg.mxu0
    %341 = vmatpush.bf16.msra.mxu0 %v274
    %342 = vmatpush.bf16.msra.mxu0 %v273
    %343 = vmatpush.bf16.msra.mxu0 %v272
    %344 = vmatpush.bf16.msra.mxu0 %v271
    %345 = vmatpush.bf16.msra.mxu0 %v270
    %346 = vmatpush.bf16.msra.mxu0 %v269
    %347 = vmatpush.bf16.msra.mxu0 %v268
    %348 = vmatpush.bf16.msra.mxu0 %v267
    %349 = vmatmul.bf16.gmra.mxu0 %v55
    %v350 = vpop.f32.mrf.mxu0
    %v351 = vadd.f32 %v338, %v350
    %v352 = vpop.f32.mrf.mxu0
    %353 = vdwg.mxu0
    %354 = vmatpush.bf16.msra.mxu0 %v282
    %355 = vmatpush.bf16.msra.mxu0 %v281
    %356 = vmatpush.bf16.msra.mxu0 %v280
    %357 = vmatpush.bf16.msra.mxu0 %v279
    %358 = vmatpush.bf16.msra.mxu0 %v278
    %359 = vmatpush.bf16.msra.mxu0 %v277
    %360 = vmatpush.bf16.msra.mxu0 %v276
    %361 = vmatpush.bf16.msra.mxu0 %v275
    %362 = vmatmul.bf16.gmra.mxu0 %v56
    %v363 = vpop.f32.mrf.mxu0
    %v364 = vadd.f32 %v351, %v363
    %v365 = vpop.f32.mrf.mxu0
    %366 = vdwg.mxu0
    %367 = vst [vmem:[%s3] sm:$0xff] %v364
    // Predicated region
    $region18: #{classifier_gan_mlp_forward.1} parent=1 // pred_check
      _
    $region19: #{classifier_gan_mlp_forward.1} parent=1 // pred_check_branch
      %369 = sbr.rel (0) target = $region21
    $region20: #{classifier_gan_mlp_forward.1} parent=1 // pred_region
      _
    $region21: #{classifier_gan_mlp_forward.1} parent=1 // pred_fallthru
      _
    // Predicated region
    $region22: #{classifier_gan_mlp_forward.1} parent=1 // pred_check
      _
    $region23: #{classifier_gan_mlp_forward.1} parent=1 // pred_check_branch
      %371 = sbr.rel (0) target = $region25
    $region24: #{classifier_gan_mlp_forward.1} parent=1 // pred_region
      _
    $region25: #{classifier_gan_mlp_forward.1} parent=1 // pred_fallthru
      _
    %372 = vsyncpa [#allocation3], 1

</llo_original>
